<compile_context>
chip_gen: v7x
topology: tpu7x:2x2x1
jax: 0.10.0
libtpu: 0.0.40
codegen_flags: <defaults>
</compile_context>

<pallas_src>
import jax
import jax.numpy as jnp
from jax.experimental import pallas as pl
from jax.experimental.pallas import tpu as pltpu

HP = 128  # padded hidden / lane width (one full vreg lane extent)


def _round_up(x, m):
    return (x + m - 1) // m * m


# ----------------------------------------------------------------------------- kernel
def actor_mlp_kernel(state_ref, w0_ref, w12_ref, w3_ref, bias_ref, out_ref):
    # Layer 0: relu(state @ W0 + b0)   (bf16 operands, fp32 accumulation)
    h = jnp.dot(state_ref[...], w0_ref[...], preferred_element_type=jnp.float32)
    h = jnp.maximum(h + bias_ref[0:1, :], 0.0).astype(jnp.bfloat16)

    # Layer 1
    h = jnp.dot(h, w12_ref[0], preferred_element_type=jnp.float32)
    h = jnp.maximum(h + bias_ref[1:2, :], 0.0).astype(jnp.bfloat16)

    # Layer 2
    h = jnp.dot(h, w12_ref[1], preferred_element_type=jnp.float32)
    h = jnp.maximum(h + bias_ref[2:3, :], 0.0).astype(jnp.bfloat16)

    # Output layer + tanh on the full lane-dense (tile_b, 128) slab (fp32 epilogue)
    o = jnp.dot(h, w3_ref[...], preferred_element_type=jnp.float32) + bias_ref[3:4, :]
    out_ref[...] = jnp.tanh(o).astype(out_ref.dtype)


# ----------------------------------------------------------------------------- params
def init_params(key, state_size, output_size, hidden=(32, 16, 8)):
    """Plain-MLP params (stored transposed: (in_features, out_features)).

    Mirrors torch.nn.Linear default init: U(-1/sqrt(fan_in), 1/sqrt(fan_in)).
    """
    sizes_in = [state_size] + list(hidden)
    sizes_out = list(hidden) + [output_size]
    keys = jax.random.split(key, 2 * len(sizes_in))
    params = []
    for li, (fi, fo) in enumerate(zip(sizes_in, sizes_out)):
        lim = float(fi) ** -0.5
        w = jax.random.uniform(keys[2 * li], (fi, fo), jnp.float32, -lim, lim)
        b = jax.random.uniform(keys[2 * li + 1], (1, fo), jnp.float32, -lim, lim)
        params.append((w, b))
    return params


def pack_params(params, hp=HP):
    """Zero-pad weights to lane-dense (…,128) blocks, cast to bf16, fold operands.

    Padded rows/lanes are zero, so they contribute nothing; padded output lanes
    hold tanh(0)=0 and must be sliced off ([:, :O]) by the caller.
    """
    (w0, b0), (w1, b1), (w2, b2), (w3, b3) = params
    state_size = w0.shape[0]
    output_size = w3.shape[1]

    def pad_w(w, rows, cols):
        out = jnp.zeros((rows, cols), jnp.float32)
        out = out.at[: w.shape[0], : w.shape[1]].set(w)
        return out.astype(jnp.bfloat16)

    def pad_b(b, cols):
        out = jnp.zeros((1, cols), jnp.float32)
        return out.at[:, : b.shape[1]].set(b)

    w12 = jnp.stack([pad_w(w1, hp, hp), pad_w(w2, hp, hp)], axis=0)        # (2,128,128) bf16
    bias = jnp.concatenate(
        [pad_b(b0, hp), pad_b(b1, hp), pad_b(b2, hp), pad_b(b3, hp)], axis=0)  # (4,128) f32

    return dict(
        w0=pad_w(w0, state_size, hp),   # (S,128) bf16
        w12=w12,
        w3=pad_w(w3, hp, hp),           # (128,128) bf16, lane-dense last layer
        bias=bias,
        output_size=output_size,
    )


# ----------------------------------------------------------------------------- wrapper
def _choose_tile(B, tile_b):
    """Batch tile: multiples of 16, as large as possible, but split a single
    large tile in two so the batch axis can shard across v7x's 2 TensorCores."""
    B16 = _round_up(B, 16)
    tile_b = _round_up(max(16, min(tile_b, B16)), 16)
    if B16 <= tile_b and B16 >= 512:      # would collapse to grid=(1,) on a big batch
        tile_b = _round_up(-(-B16 // 2), 16)
    B_pad = _round_up(B16, tile_b)
    return tile_b, B_pad


def actor_forward(state, packed, *, tile_b=512):
    """state: (B, S) fp32 -> (B, O) fp32, tanh-activated."""
    B, S = state.shape
    O = packed["output_size"]

    tile_b, B_pad = _choose_tile(B, tile_b)
    x = state.astype(jnp.bfloat16)          # host-side cast: half the streamed bytes
    if B_pad != B:
        x = jnp.pad(x, ((0, B_pad - B), (0, 0)))
    grid = (B_pad // tile_b,)

    const2 = lambda i: (0, 0)                # weights/biases resident across the grid
    const3 = lambda i: (0, 0, 0)
    in_specs = [
        pl.BlockSpec((tile_b, S), lambda i: (i, 0)),
        pl.BlockSpec(packed["w0"].shape, const2),
        pl.BlockSpec(packed["w12"].shape, const3),
        pl.BlockSpec(packed["w3"].shape, const2),
        pl.BlockSpec(packed["bias"].shape, const2),
    ]
    out_specs = pl.BlockSpec((tile_b, HP), lambda i: (i, 0))

    flops = 2 * B_pad * HP * (S + 3 * HP)
    transcendentals = B_pad * HP
    bytes_accessed = int(
        x.size * 2 + B_pad * HP * 4
        + packed["w0"].size * 2 + packed["w12"].size * 2
        + packed["w3"].size * 2 + packed["bias"].size * 4)

    out = pl.pallas_call(
        actor_mlp_kernel,
        grid=grid,
        in_specs=in_specs,
        out_specs=out_specs,
        out_shape=jax.ShapeDtypeStruct((B_pad, HP), jnp.float32),
        compiler_params=pltpu.CompilerParams(dimension_semantics=("parallel",)),
        cost_estimate=pl.CostEstimate(
            flops=flops, transcendentals=transcendentals, bytes_accessed=bytes_accessed),
    )(x, packed["w0"], packed["w12"], packed["w3"], packed["bias"])
    return out[:B, :O]


# ----------------------------------------------------------------------------- references
def actor_reference_packed(state, packed):
    """Pure-JAX reference using the exact same padded bf16 weights / casts."""
    O = packed["output_size"]
    b = packed["bias"]
    x = state.astype(jnp.bfloat16)
    h = jnp.maximum(jnp.dot(x, packed["w0"], preferred_element_type=jnp.float32) + b[0:1], 0.0)
    h = jnp.maximum(jnp.dot(h.astype(jnp.bfloat16), packed["w12"][0],
                            preferred_element_type=jnp.float32) + b[1:2], 0.0)
    h = jnp.maximum(jnp.dot(h.astype(jnp.bfloat16), packed["w12"][1],
                            preferred_element_type=jnp.float32) + b[2:3], 0.0)
    o = jnp.dot(h.astype(jnp.bfloat16), packed["w3"],
                preferred_element_type=jnp.float32) + b[3:4]
    return jnp.tanh(o)[:, :O]


def actor_reference_fp32(state, params):
    """Full-precision reference on the raw (unpadded) params."""
    (w0, b0), (w1, b1), (w2, b2), (w3, b3) = params
    h = jax.nn.relu(state @ w0 + b0)
    h = jax.nn.relu(h @ w1 + b1)
    h = jax.nn.relu(h @ w2 + b2)
    return jnp.tanh(h @ w3 + b3)


# ----------------------------------------------------------------------------- main
if __name__ == "__main__":
    state_size, output_size = 16, 4

    key = jax.random.PRNGKey(0)
    kp, ks, ks2 = jax.random.split(key, 3)
    params = init_params(kp, state_size, output_size)
    packed = pack_params(params)

    # Small batch: single grid step, exercises batch padding (48 -> 48) and the
    # lane-dense output slice.
    batch = 48
    state = jax.random.normal(ks, (batch, state_size), jnp.float32)
    out = jax.block_until_ready(actor_forward(state, packed))
    assert out.shape == (batch, output_size)

    ref_bf16 = actor_reference_packed(state, packed)
    assert jnp.allclose(out, ref_bf16, atol=1e-4, rtol=1e-4), "mismatch vs bf16 reference"

    ref_f32 = actor_reference_fp32(state, params)
    assert jnp.allclose(out, ref_f32, atol=5e-2, rtol=5e-2), "mismatch vs fp32 reference"

    # Larger batch: exercises the multi-step grid (two 512-row tiles) and
    # batch padding at scale.
    batch2 = 544
    state2 = jax.random.normal(ks2, (batch2, state_size), jnp.float32)
    out2 = jax.block_until_ready(actor_forward(state2, packed))
    assert out2.shape == (batch2, output_size)
    ref2 = actor_reference_packed(state2, packed)
    assert jnp.allclose(out2, ref2, atol=1e-4, rtol=1e-4), "mismatch vs bf16 reference (large batch)"

    print("KERNEL_OK")
</pallas_src>

<mosaic_0001>
module attributes {stable_mosaic.version = 11 : i64} {
  func.func @actor_mlp_kernel(%arg0: i32, %arg1: memref<48x16xbf16, #tpu.memory_space<vmem>>, %arg2: memref<16x128xbf16, #tpu.memory_space<vmem>>, %arg3: memref<2x128x128xbf16, #tpu.memory_space<vmem>>, %arg4: memref<128x128xbf16, #tpu.memory_space<vmem>>, %arg5: memref<4x128xf32, #tpu.memory_space<vmem>>, %arg6: memref<48x128xf32, #tpu.memory_space<vmem>>) attributes {dimension_semantics = [#tpu.dimension_semantics<parallel>], iteration_bounds = array<i64: 1>, scalar_prefetch = 0 : i64, scratch_operands = 0 : i64, tpu.core_type = #tpu.core_type<tc>, window_params = [{transform_indices = @transform_0, window_bounds = array<i64: 48, 16>}, {pipeline_mode = #tpu.pipeline_mode<synchronous>, transform_indices = @transform_1, window_bounds = array<i64: 16, 128>}, {pipeline_mode = #tpu.pipeline_mode<synchronous>, transform_indices = @transform_2, window_bounds = array<i64: 2, 128, 128>}, {pipeline_mode = #tpu.pipeline_mode<synchronous>, transform_indices = @transform_3, window_bounds = array<i64: 128, 128>}, {pipeline_mode = #tpu.pipeline_mode<synchronous>, transform_indices = @transform_4, window_bounds = array<i64: 4, 128>}, {transform_indices = @transform_5, window_bounds = array<i64: 48, 128>}]} {
    %c0 = arith.constant 0 : index
    %c0_0 = arith.constant 0 : index
    %0 = vector.load %arg1[%c0, %c0_0] : memref<48x16xbf16, #tpu.memory_space<vmem>>, vector<48x16xbf16>
    %c0_1 = arith.constant 0 : index
    %c0_2 = arith.constant 0 : index
    %1 = vector.load %arg2[%c0_1, %c0_2] : memref<16x128xbf16, #tpu.memory_space<vmem>>, vector<16x128xbf16>
    %cst = arith.constant dense<0.000000e+00> : vector<48x128xf32>
    %2 = tpu.matmul %0, %1, %cst {dimension_numbers = #tpu.dot_dimension_numbers<[1], [0], [0], [1], [0, 0, 1, 1], [], []>} : vector<48x16xbf16>, vector<16x128xbf16>, vector<48x128xf32> -> vector<48x128xf32>
    %c0_3 = arith.constant 0 : index
    %c0_4 = arith.constant 0 : index
    %3 = vector.load %arg5[%c0_3, %c0_4] : memref<4x128xf32, #tpu.memory_space<vmem>>, vector<1x128xf32>
    %4 = vector.broadcast %3 : vector<1x128xf32> to vector<48x128xf32>
    %5 = arith.addf %2, %4 : vector<48x128xf32>
    %cst_5 = arith.constant 0.000000e+00 : f32
    %6 = vector.broadcast %cst_5 : f32 to vector<48x128xf32>
    %7 = arith.maximumf %5, %6 : vector<48x128xf32>
    %8 = arith.truncf %7 : vector<48x128xf32> to vector<48x128xbf16>
    %c0_6 = arith.constant 0 : index
    %c0_7 = arith.constant 0 : index
    %c0_8 = arith.constant 0 : index
    %9 = vector.load %arg3[%c0_6, %c0_7, %c0_8] : memref<2x128x128xbf16, #tpu.memory_space<vmem>>, vector<1x128x128xbf16>
    %10 = vector.shape_cast %9 : vector<1x128x128xbf16> to vector<128x128xbf16>
    %cst_9 = arith.constant dense<0.000000e+00> : vector<48x128xf32>
    %11 = tpu.matmul %8, %10, %cst_9 {dimension_numbers = #tpu.dot_dimension_numbers<[1], [0], [0], [1], [0, 0, 1, 1], [], []>} : vector<48x128xbf16>, vector<128x128xbf16>, vector<48x128xf32> -> vector<48x128xf32>
    %c1 = arith.constant 1 : index
    %c0_10 = arith.constant 0 : index
    %12 = vector.load %arg5[%c1, %c0_10] : memref<4x128xf32, #tpu.memory_space<vmem>>, vector<1x128xf32>
    %13 = vector.broadcast %12 : vector<1x128xf32> to vector<48x128xf32>
    %14 = arith.addf %11, %13 : vector<48x128xf32>
    %cst_11 = arith.constant 0.000000e+00 : f32
    %15 = vector.broadcast %cst_11 : f32 to vector<48x128xf32>
    %16 = arith.maximumf %14, %15 : vector<48x128xf32>
    %17 = arith.truncf %16 : vector<48x128xf32> to vector<48x128xbf16>
    %c1_12 = arith.constant 1 : index
    %c0_13 = arith.constant 0 : index
    %c0_14 = arith.constant 0 : index
    %18 = vector.load %arg3[%c1_12, %c0_13, %c0_14] : memref<2x128x128xbf16, #tpu.memory_space<vmem>>, vector<1x128x128xbf16>
    %19 = vector.shape_cast %18 : vector<1x128x128xbf16> to vector<128x128xbf16>
    %cst_15 = arith.constant dense<0.000000e+00> : vector<48x128xf32>
    %20 = tpu.matmul %17, %19, %cst_15 {dimension_numbers = #tpu.dot_dimension_numbers<[1], [0], [0], [1], [0, 0, 1, 1], [], []>} : vector<48x128xbf16>, vector<128x128xbf16>, vector<48x128xf32> -> vector<48x128xf32>
    %c2 = arith.constant 2 : index
    %c0_16 = arith.constant 0 : index
    %21 = vector.load %arg5[%c2, %c0_16] : memref<4x128xf32, #tpu.memory_space<vmem>>, vector<1x128xf32>
    %22 = vector.broadcast %21 : vector<1x128xf32> to vector<48x128xf32>
    %23 = arith.addf %20, %22 : vector<48x128xf32>
    %cst_17 = arith.constant 0.000000e+00 : f32
    %24 = vector.broadcast %cst_17 : f32 to vector<48x128xf32>
    %25 = arith.maximumf %23, %24 : vector<48x128xf32>
    %26 = arith.truncf %25 : vector<48x128xf32> to vector<48x128xbf16>
    %c0_18 = arith.constant 0 : index
    %c0_19 = arith.constant 0 : index
    %27 = vector.load %arg4[%c0_18, %c0_19] : memref<128x128xbf16, #tpu.memory_space<vmem>>, vector<128x128xbf16>
    %cst_20 = arith.constant dense<0.000000e+00> : vector<48x128xf32>
    %28 = tpu.matmul %26, %27, %cst_20 {dimension_numbers = #tpu.dot_dimension_numbers<[1], [0], [0], [1], [0, 0, 1, 1], [], []>} : vector<48x128xbf16>, vector<128x128xbf16>, vector<48x128xf32> -> vector<48x128xf32>
    %c3 = arith.constant 3 : index
    %c0_21 = arith.constant 0 : index
    %29 = vector.load %arg5[%c3, %c0_21] : memref<4x128xf32, #tpu.memory_space<vmem>>, vector<1x128xf32>
    %30 = vector.broadcast %29 : vector<1x128xf32> to vector<48x128xf32>
    %31 = arith.addf %28, %30 : vector<48x128xf32>
    %32 = math.tanh %31 : vector<48x128xf32>
    %c0_22 = arith.constant 0 : index
    %c0_23 = arith.constant 0 : index
    %33 = vector.load %arg6[%c0_22, %c0_23] : memref<48x128xf32, #tpu.memory_space<vmem>>, vector<48x128xf32>
    tpu.vector_store %arg6[%c0_22, %c0_23], %32 {strides = array<i32>} : memref<48x128xf32, #tpu.memory_space<vmem>>, vector<48x128xf32>,
    return
  }
  func.func @transform_0(%arg0: i32) -> (i32, i32) {
    %c0_i32 = arith.constant 0 : i32
    %c0_i32_0 = arith.constant 0 : i32
    return %arg0, %c0_i32 : i32, i32
  }
  func.func @transform_1(%arg0: i32) -> (i32, i32) {
    %c0_i32 = arith.constant 0 : i32
    %c0_i32_0 = arith.constant 0 : i32
    %c0_i32_1 = arith.constant 0 : i32
    return %c0_i32, %c0_i32_0 : i32, i32
  }
  func.func @transform_2(%arg0: i32) -> (i32, i32, i32) {
    %c0_i32 = arith.constant 0 : i32
    %c0_i32_0 = arith.constant 0 : i32
    %c0_i32_1 = arith.constant 0 : i32
    %c0_i32_2 = arith.constant 0 : i32
    return %c0_i32, %c0_i32_0, %c0_i32_1 : i32, i32, i32
  }
  func.func @transform_3(%arg0: i32) -> (i32, i32) {
    %c0_i32 = arith.constant 0 : i32
    %c0_i32_0 = arith.constant 0 : i32
    %c0_i32_1 = arith.constant 0 : i32
    return %c0_i32, %c0_i32_0 : i32, i32
  }
  func.func @transform_4(%arg0: i32) -> (i32, i32) {
    %c0_i32 = arith.constant 0 : i32
    %c0_i32_0 = arith.constant 0 : i32
    %c0_i32_1 = arith.constant 0 : i32
    return %c0_i32, %c0_i32_0 : i32, i32
  }
  func.func @transform_5(%arg0: i32) -> (i32, i32) {
    %c0_i32 = arith.constant 0 : i32
    %c0_i32_0 = arith.constant 0 : i32
    return %arg0, %c0_i32 : i32, i32
  }
}

</mosaic_0001>

<llo_original>
// kernel: tpu_custom_call.1
$region0: #{tpu_custom_call.1}
  #allocation0 [shape = 'u32[]', space=smem, size = 0x4, offset = 0x4, fixed_abs, tag = 'smem constant byte address 0x4 - core index']
  #allocation1 [shape = 'u32[144,128]{1,0:T(1,128)}', space=vmem, size = 0x12000, scoped, tag = 'internal scratch']
  %s0 = inlined_call_operand.vmem [shape: bf16[48,16], index: 0, kind: input, shape index: {}]
  %s1 = inlined_call_operand.vmem [shape: bf16[16,128], index: 1, kind: input, shape index: {}]
  %s2 = inlined_call_operand.hbm [shape: bf16[2,128,128], index: 2, kind: input, shape index: {}]
  %s3 = inlined_call_operand.hbm [shape: bf16[128,128], index: 3, kind: input, shape index: {}]
  %s4 = inlined_call_operand.vmem [shape: f32[4,128], index: 4, kind: input, shape index: {}]
  %s5 = inlined_call_operand.hbm [shape: f32[48,128], index: 5, kind: output, shape index: {}]
  %s6 = sld [smem:[#allocation0]]
  $region38: #{tpu_custom_call.1} parent=0
    _
  %s8 = ssub.s32 1, %s6
  %s9 = scalar_select 0, %s8, %s6
  $region1: #{tpu_custom_call.1} parent=0
    #allocation2 [shape = 'u8[65536]{0}', space=vmem, size = 0x10000, scoped, tag = 'input window, operand 2, single buffered']
    #allocation3 [shape = 's32[1]{0}', space=sflag, size = 0x4, scoped, tag = 'scoped memory for tpu_custom_call.1']
    #allocation4 [shape = 's32[1]{0}', space=sflag, size = 0x4, scoped, tag = 'scoped memory for tpu_custom_call.1']
    #allocation5 [shape = 'u8[32768]{0}', space=vmem, size = 0x8000, scoped, tag = 'input window, operand 3, single buffered']
    #allocation6 [shape = 's32[1]{0}', space=sflag, size = 0x4, scoped, tag = 'scoped memory for tpu_custom_call.1']
    #allocation7 [shape = 'u8[24576]{0}', space=vmem, size = 0x6000, scoped, tag = 'output window, operand 0, single buffered']
    %10 = vsyncpa [#allocation3], 0
    %11 = vsyncpa [#allocation6], 0
    %12 = vsyncpa [#allocation4], 0
    // Predicated region
    $region2: #{tpu_custom_call.1} parent=1 // pred_check
      _
    $region3: #{tpu_custom_call.1} parent=1 // pred_check_branch
      %14 = sbr.rel (0) target = $region5
    $region4: #{tpu_custom_call.1} parent=1 // pred_region
      _
    $region5: #{tpu_custom_call.1} parent=1 // pred_fallthru
      _
    // Predicated region
    $region6: #{tpu_custom_call.1} parent=1 // pred_check
      _
    $region7: #{tpu_custom_call.1} parent=1 // pred_check_branch
      %16 = sbr.rel (0) target = $region9
    $region8: #{tpu_custom_call.1} parent=1 // pred_region
      _
    $region9: #{tpu_custom_call.1} parent=1 // pred_fallthru
      _
    // Predicated region
    $region10: #{tpu_custom_call.1} parent=1 // pred_check
      _
    $region11: #{tpu_custom_call.1} parent=1 // pred_check_branch
      %18 = sbr.rel (0) target = $region13
    $region12: #{tpu_custom_call.1} parent=1 // pred_region
      %s20 = ssub.s32 2048, 2048
      %21 = vsyncadd [#allocation3], %s20
      %s22 = sshll.u32 [#allocation2], 4
      %s23 = int_to_ptr.vmem [resolvable:$true] %s22
      %28 = dma.hbm_to_vmem [thread:$0]  %s2, 2048, %s23, [#allocation3], 64, 64, 4
    $region13: #{tpu_custom_call.1} parent=1 // pred_fallthru
      _
    // Predicated region
    $region14: #{tpu_custom_call.1} parent=1 // pred_check
      _
    $region15: #{tpu_custom_call.1} parent=1 // pred_check_branch
      %30 = sbr.rel (0) target = $region17
    $region16: #{tpu_custom_call.1} parent=1 // pred_region
      %s32 = ssub.s32 1024, 1024
      %33 = vsyncadd [#allocation6], %s32
      %s34 = sshll.u32 [#allocation5], 4
      %s35 = int_to_ptr.vmem [resolvable:$true] %s34
      %40 = dma.hbm_to_vmem [thread:$0]  %s3, 1024, %s35, [#allocation6], 64, 64, 4
    $region17: #{tpu_custom_call.1} parent=1 // pred_fallthru
      _
    // Predicated region
    $region18: #{tpu_custom_call.1} parent=1 // pred_check
      _
    $region19: #{tpu_custom_call.1} parent=1 // pred_check_branch
      %42 = sbr.rel (0) target = $region21
    $region20: #{tpu_custom_call.1} parent=1 // pred_region
      _
    $region21: #{tpu_custom_call.1} parent=1 // pred_fallthru
      _
    // Predicated region
    $region22: #{tpu_custom_call.1} parent=1 // pred_check
      _
    $region23: #{tpu_custom_call.1} parent=1 // pred_check_branch
      %44 = sbr.rel (0) target = $region25
    $region24: #{tpu_custom_call.1} parent=1 // pred_region
      %45 = dma.done [#allocation3], 2048
    $region25: #{tpu_custom_call.1} parent=1 // pred_fallthru
      _
    // Predicated region
    $region26: #{tpu_custom_call.1} parent=1 // pred_check
      _
    $region27: #{tpu_custom_call.1} parent=1 // pred_check_branch
      %47 = sbr.rel (0) target = $region29
    $region28: #{tpu_custom_call.1} parent=1 // pred_region
      %48 = dma.done [#allocation6], 1024
    $region29: #{tpu_custom_call.1} parent=1 // pred_fallthru
      _
    %v50 = vld [vmem:[%s0] sm:$0xf]
    %v51 = vld [vmem:[%s0 + $0x4] sm:$0xf]
    %v52 = vld [vmem:[%s0 + $0x8] sm:$0xf]
    %v53 = vld [vmem:[%s0 + $0xc] sm:$0xf]
    %v54 = vld [vmem:[%s0 + $0x10] sm:$0xf]
    %v55 = vld [vmem:[%s0 + $0x14] sm:$0xf]
    %v56 = vld [vmem:[%s1] sm:$0xf]
    %v57 = vld [vmem:[%s1 + $0x4] sm:$0xf]
    %v58 = vld [vmem:[%s4] sm:$0x1]
    %v59 = vlaneseq
    %v60 = vshrl.u32 %v59, 7
    %v61 = vsub.s32 0, %v60
    %v62 = vrot.slane %v58, %v61
    %v69 = vunpack.c.l.b16 %v50
    %v70 = vunpack.c.l.b16 %v51
    %v71 = vunpack.c.l.b16 %v52
    %v72 = vunpack.c.l.b16 %v53
    %v73 = vunpack.c.l.b16 %v54
    %v74 = vunpack.c.l.b16 %v55
    %v75 = vpack.c.b16 %v70, %v69
    %v76 = vpack.c.b16 %v72, %v71
    %v77 = vpack.c.b16 %v74, %v73
    %v80 = vunpack.c.l.b16 %v56
    %v81 = vunpack.c.l.b16 %v57
    %v82 = vpack.c.b16 %v81, %v80
    %vm84 = vcmask 130048
    %v86 = vsel %vm84, %v75, 0
    %v89 = vsel %vm84, %v76, 0
    %v92 = vsel %vm84, %v77, 0
    %94 = vmatprep.subr.bf16.mxu0 0
    %95 = vmatpush1.bf16.msra.mxu0 %v82
    %96 = vmatprep.subr.bf16.mxu0 0
    %97 = vmatpush1.bf16.msra.mxu0 0
    %98 = vmatprep.subr.bf16.mxu0 0
    %99 = vmatpush1.bf16.msra.mxu0 0
    %100 = vmatprep.subr.bf16.mxu0 0
    %101 = vmatpush1.bf16.msra.mxu0 0
    %102 = vmatprep.subr.bf16.mxu0 0
    %103 = vmatpush1.bf16.msra.mxu0 0
    %104 = vmatprep.subr.bf16.mxu0 0
    %105 = vmatpush1.bf16.msra.mxu0 0
    %106 = vmatprep.subr.bf16.mxu0 0
    %107 = vmatpush1.bf16.msra.mxu0 0
    %108 = vmatprep.subr.bf16.mxu0 0
    %109 = vmatpush1.bf16.msra.mxu0 0
    %110 = vmatprep.subr.bf16.mxu0 0
    %111 = vmatpush1.bf16.msra.mxu0 0
    %112 = vmatprep.subr.bf16.mxu0 0
    %113 = vmatpush1.bf16.msra.mxu0 0
    %114 = vmatprep.subr.bf16.mxu0 0
    %115 = vmatpush1.bf16.msra.mxu0 0
    %116 = vmatprep.subr.bf16.mxu0 0
    %117 = vmatpush1.bf16.msra.mxu0 0
    %118 = vmatprep.subr.bf16.mxu0 0
    %119 = vmatpush1.bf16.msra.mxu0 0
    %120 = vmatprep.subr.bf16.mxu0 0
    %121 = vmatpush1.bf16.msra.mxu0 0
    %122 = vmatprep.subr.bf16.mxu0 0
    %123 = vmatpush1.bf16.msra.mxu0 0
    %124 = vmatprep.subr.bf16.mxu0 0
    %125 = vmatpush1.bf16.msra.mxu0 0
    %126 = vmatprep.mubr.bf16.mxu0 0
    %127 = vmatmul.mubr.bf16.gmra.mrb[0].mxu0 %v86
    %v128 = vpop.f32.mrb[0].mxu0
    %v129 = vadd.f32 %v62, %v128
    %v130 = vpop.f32.mrb[0].mxu0
    %v131 = vpop.f32.mrb[0].mxu0
    %v132 = vadd.f32 %v62, %v131
    %v133 = vpop.f32.mrb[0].mxu0
    %134 = vmatprep.mubr.bf16.mxu0 0
    %135 = vmatmul.mubr.bf16.gmra.mrb[0].mxu0 %v89
    %v136 = vpop.f32.mrb[0].mxu0
    %v137 = vadd.f32 %v62, %v136
    %v138 = vpop.f32.mrb[0].mxu0
    %v139 = vpop.f32.mrb[0].mxu0
    %v140 = vadd.f32 %v62, %v139
    %v141 = vpop.f32.mrb[0].mxu0
    %142 = vmatprep.mubr.bf16.mxu0 0
    %143 = vmatmul.mubr.bf16.gmra.mrb[0].mxu0 %v92
    %v144 = vpop.f32.mrb[0].mxu0
    %v145 = vadd.f32 %v62, %v144
    %v146 = vpop.f32.mrb[0].mxu0
    %v147 = vpop.f32.mrb[0].mxu0
    %v148 = vadd.f32 %v62, %v147
    %v149 = vpop.f32.mrb[0].mxu0
    %150 = vdwg.mxu0
    %v151 = vmax.f32 %v129, 0.0
    %v152 = vmax.f32 %v132, 0.0
    %v153 = vmax.f32 %v137, 0.0
    %v154 = vmax.f32 %v140, 0.0
    %v155 = vmax.f32 %v145, 0.0
    %v156 = vmax.f32 %v148, 0.0
    %v157 = vpack.c.bf16 %v152, %v151
    %v158 = vpack.c.bf16 %v154, %v153
    %v159 = vpack.c.bf16 %v156, %v155
    %v160 = vld [vmem:[#allocation2] sm:$0xf]
    %v161 = vld [vmem:[#allocation2 + $0x4] sm:$0xf]
    %v162 = vld [vmem:[#allocation2 + $0x8] sm:$0xf]
    %v163 = vld [vmem:[#allocation2 + $0xc] sm:$0xf]
    %v164 = vld [vmem:[#allocation2 + $0x10] sm:$0xf]
    %v165 = vld [vmem:[#allocation2 + $0x14] sm:$0xf]
    %v166 = vld [vmem:[#allocation2 + $0x18] sm:$0xf]
    %v167 = vld [vmem:[#allocation2 + $0x1c] sm:$0xf]
    %v168 = vld [vmem:[#allocation2 + $0x20] sm:$0xf]
    %v169 = vld [vmem:[#allocation2 + $0x24] sm:$0xf]
    %v170 = vld [vmem:[#allocation2 + $0x28] sm:$0xf]
    %v171 = vld [vmem:[#allocation2 + $0x2c] sm:$0xf]
    %v172 = vld [vmem:[#allocation2 + $0x30] sm:$0xf]
    %v173 = vld [vmem:[#allocation2 + $0x34] sm:$0xf]
    %v174 = vld [vmem:[#allocation2 + $0x38] sm:$0xf]
    %v175 = vld [vmem:[#allocation2 + $0x3c] sm:$0xf]
    %v176 = vld [vmem:[%s4 + $0x1] sm:$0x1]
    %v177 = vlaneseq
    %v178 = vshrl.u32 %v177, 7
    %v179 = vsub.s32 0, %v178
    %v180 = vrot.slane %v176, %v179
    %v197 = vunpack.c.l.b16 %v160
    %v198 = vunpack.c.l.b16 %v161
    %v199 = vunpack.c.l.b16 %v162
    %v200 = vunpack.c.l.b16 %v163
    %v201 = vunpack.c.l.b16 %v164
    %v202 = vunpack.c.l.b16 %v165
    %v203 = vunpack.c.l.b16 %v166
    %v204 = vunpack.c.l.b16 %v167
    %v205 = vunpack.c.l.b16 %v168
    %v206 = vunpack.c.l.b16 %v169
    %v207 = vunpack.c.l.b16 %v170
    %v208 = vunpack.c.l.b16 %v171
    %v209 = vunpack.c.l.b16 %v172
    %v210 = vunpack.c.l.b16 %v173
    %v211 = vunpack.c.l.b16 %v174
    %v212 = vunpack.c.l.b16 %v175
    %v213 = vpack.c.b16 %v198, %v197
    %v214 = vpack.c.b16 %v200, %v199
    %v215 = vpack.c.b16 %v202, %v201
    %v216 = vpack.c.b16 %v204, %v203
    %v217 = vpack.c.b16 %v206, %v205
    %v218 = vpack.c.b16 %v208, %v207
    %v219 = vpack.c.b16 %v210, %v209
    %v220 = vpack.c.b16 %v212, %v211
    %229 = vmatprep.subr.bf16.mxu0 0
    %230 = vmatpush1.bf16.msra.mxu0 %v213
    %231 = vmatprep.subr.bf16.mxu0 0
    %232 = vmatpush1.bf16.msra.mxu0 %v214
    %233 = vmatprep.subr.bf16.mxu0 0
    %234 = vmatpush1.bf16.msra.mxu0 %v215
    %235 = vmatprep.subr.bf16.mxu0 0
    %236 = vmatpush1.bf16.msra.mxu0 %v216
    %237 = vmatprep.subr.bf16.mxu0 0
    %238 = vmatpush1.bf16.msra.mxu0 %v217
    %239 = vmatprep.subr.bf16.mxu0 0
    %240 = vmatpush1.bf16.msra.mxu0 %v218
    %241 = vmatprep.subr.bf16.mxu0 0
    %242 = vmatpush1.bf16.msra.mxu0 %v219
    %243 = vmatprep.subr.bf16.mxu0 0
    %244 = vmatpush1.bf16.msra.mxu0 %v220
    %245 = vmatprep.subr.bf16.mxu0 0
    %246 = vmatpush1.bf16.msra.mxu0 0
    %247 = vmatprep.subr.bf16.mxu0 0
    %248 = vmatpush1.bf16.msra.mxu0 0
    %249 = vmatprep.subr.bf16.mxu0 0
    %250 = vmatpush1.bf16.msra.mxu0 0
    %251 = vmatprep.subr.bf16.mxu0 0
    %252 = vmatpush1.bf16.msra.mxu0 0
    %253 = vmatprep.subr.bf16.mxu0 0
    %254 = vmatpush1.bf16.msra.mxu0 0
    %255 = vmatprep.subr.bf16.mxu0 0
    %256 = vmatpush1.bf16.msra.mxu0 0
    %257 = vmatprep.subr.bf16.mxu0 0
    %258 = vmatpush1.bf16.msra.mxu0 0
    %259 = vmatprep.subr.bf16.mxu0 0
    %260 = vmatpush1.bf16.msra.mxu0 0
    %261 = vmatprep.mubr.bf16.mxu0 0
    %262 = vmatmul.mubr.bf16.gmra.mrb[0].mxu0 %v157
    %v263 = vpop.f32.mrb[0].mxu0
    %v264 = vadd.f32 %v180, %v263
    %v265 = vpop.f32.mrb[0].mxu0
    %v266 = vpop.f32.mrb[0].mxu0
    %v267 = vadd.f32 %v180, %v266
    %v268 = vpop.f32.mrb[0].mxu0
    %269 = vmatprep.mubr.bf16.mxu0 0
    %270 = vmatmul.mubr.bf16.gmra.mrb[0].mxu0 %v158
    %v271 = vpop.f32.mrb[0].mxu0
    %v272 = vadd.f32 %v180, %v271
    %v273 = vpop.f32.mrb[0].mxu0
    %v274 = vpop.f32.mrb[0].mxu0
    %v275 = vadd.f32 %v180, %v274
    %v276 = vpop.f32.mrb[0].mxu0
    %277 = vmatprep.mubr.bf16.mxu0 0
    %278 = vmatmul.mubr.bf16.gmra.mrb[0].mxu0 %v159
    %v279 = vpop.f32.mrb[0].mxu0
    %v280 = vadd.f32 %v180, %v279
    %v281 = vpop.f32.mrb[0].mxu0
    %v282 = vpop.f32.mrb[0].mxu0
    %v283 = vadd.f32 %v180, %v282
    %v284 = vpop.f32.mrb[0].mxu0
    %285 = vdwg.mxu0
    %v286 = vmax.f32 %v264, 0.0
    %v287 = vmax.f32 %v267, 0.0
    %v288 = vmax.f32 %v272, 0.0
    %v289 = vmax.f32 %v275, 0.0
    %v290 = vmax.f32 %v280, 0.0
    %v291 = vmax.f32 %v283, 0.0
    %v292 = vpack.c.bf16 %v287, %v286
    %v293 = vpack.c.bf16 %v289, %v288
    %v294 = vpack.c.bf16 %v291, %v290
    %s295 = scalar_lea.vmem [#allocation2], 64
    %v296 = vld [vmem:[%s295] sm:$0xf]
    %v297 = vld [vmem:[%s295 + $0x4] sm:$0xf]
    %v298 = vld [vmem:[%s295 + $0x8] sm:$0xf]
    %v299 = vld [vmem:[%s295 + $0xc] sm:$0xf]
    %v300 = vld [vmem:[%s295 + $0x10] sm:$0xf]
    %v301 = vld [vmem:[%s295 + $0x14] sm:$0xf]
    %v302 = vld [vmem:[%s295 + $0x18] sm:$0xf]
    %v303 = vld [vmem:[%s295 + $0x1c] sm:$0xf]
    %v304 = vld [vmem:[%s295 + $0x20] sm:$0xf]
    %v305 = vld [vmem:[%s295 + $0x24] sm:$0xf]
    %v306 = vld [vmem:[%s295 + $0x28] sm:$0xf]
    %v307 = vld [vmem:[%s295 + $0x2c] sm:$0xf]
    %v308 = vld [vmem:[%s295 + $0x30] sm:$0xf]
    %v309 = vld [vmem:[%s295 + $0x34] sm:$0xf]
    %v310 = vld [vmem:[%s295 + $0x38] sm:$0xf]
    %v311 = vld [vmem:[%s295 + $0x3c] sm:$0xf]
    %v312 = vld [vmem:[%s4 + $0x2] sm:$0x1]
    %v313 = vlaneseq
    %v314 = vshrl.u32 %v313, 7
    %v315 = vsub.s32 0, %v314
    %v316 = vrot.slane %v312, %v315
    %v333 = vunpack.c.l.b16 %v296
    %v334 = vunpack.c.l.b16 %v297
    %v335 = vunpack.c.l.b16 %v298
    %v336 = vunpack.c.l.b16 %v299
    %v337 = vunpack.c.l.b16 %v300
    %v338 = vunpack.c.l.b16 %v301
    %v339 = vunpack.c.l.b16 %v302
    %v340 = vunpack.c.l.b16 %v303
    %v341 = vunpack.c.l.b16 %v304
    %v342 = vunpack.c.l.b16 %v305
    %v343 = vunpack.c.l.b16 %v306
    %v344 = vunpack.c.l.b16 %v307
    %v345 = vunpack.c.l.b16 %v308
    %v346 = vunpack.c.l.b16 %v309
    %v347 = vunpack.c.l.b16 %v310
    %v348 = vunpack.c.l.b16 %v311
    %v349 = vpack.c.b16 %v334, %v333
    %v350 = vpack.c.b16 %v336, %v335
    %v351 = vpack.c.b16 %v338, %v337
    %v352 = vpack.c.b16 %v340, %v339
    %v353 = vpack.c.b16 %v342, %v341
    %v354 = vpack.c.b16 %v344, %v343
    %v355 = vpack.c.b16 %v346, %v345
    %v356 = vpack.c.b16 %v348, %v347
    %365 = vmatprep.subr.bf16.mxu0 0
    %366 = vmatpush1.bf16.msra.mxu0 %v349
    %367 = vmatprep.subr.bf16.mxu0 0
    %368 = vmatpush1.bf16.msra.mxu0 %v350
    %369 = vmatprep.subr.bf16.mxu0 0
    %370 = vmatpush1.bf16.msra.mxu0 %v351
    %371 = vmatprep.subr.bf16.mxu0 0
    %372 = vmatpush1.bf16.msra.mxu0 %v352
    %373 = vmatprep.subr.bf16.mxu0 0
    %374 = vmatpush1.bf16.msra.mxu0 %v353
    %375 = vmatprep.subr.bf16.mxu0 0
    %376 = vmatpush1.bf16.msra.mxu0 %v354
    %377 = vmatprep.subr.bf16.mxu0 0
    %378 = vmatpush1.bf16.msra.mxu0 %v355
    %379 = vmatprep.subr.bf16.mxu0 0
    %380 = vmatpush1.bf16.msra.mxu0 %v356
    %381 = vmatprep.subr.bf16.mxu0 0
    %382 = vmatpush1.bf16.msra.mxu0 0
    %383 = vmatprep.subr.bf16.mxu0 0
    %384 = vmatpush1.bf16.msra.mxu0 0
    %385 = vmatprep.subr.bf16.mxu0 0
    %386 = vmatpush1.bf16.msra.mxu0 0
    %387 = vmatprep.subr.bf16.mxu0 0
    %388 = vmatpush1.bf16.msra.mxu0 0
    %389 = vmatprep.subr.bf16.mxu0 0
    %390 = vmatpush1.bf16.msra.mxu0 0
    %391 = vmatprep.subr.bf16.mxu0 0
    %392 = vmatpush1.bf16.msra.mxu0 0
    %393 = vmatprep.subr.bf16.mxu0 0
    %394 = vmatpush1.bf16.msra.mxu0 0
    %395 = vmatprep.subr.bf16.mxu0 0
    %396 = vmatpush1.bf16.msra.mxu0 0
    %397 = vmatprep.mubr.bf16.mxu0 0
    %398 = vmatmul.mubr.bf16.gmra.mrb[0].mxu0 %v292
    %v399 = vpop.f32.mrb[0].mxu0
    %v400 = vadd.f32 %v316, %v399
    %v401 = vpop.f32.mrb[0].mxu0
    %v402 = vpop.f32.mrb[0].mxu0
    %v403 = vadd.f32 %v316, %v402
    %v404 = vpop.f32.mrb[0].mxu0
    %405 = vmatprep.mubr.bf16.mxu0 0
    %406 = vmatmul.mubr.bf16.gmra.mrb[0].mxu0 %v293
    %v407 = vpop.f32.mrb[0].mxu0
    %v408 = vadd.f32 %v316, %v407
    %v409 = vpop.f32.mrb[0].mxu0
    %v410 = vpop.f32.mrb[0].mxu0
    %v411 = vadd.f32 %v316, %v410
    %v412 = vpop.f32.mrb[0].mxu0
    %413 = vmatprep.mubr.bf16.mxu0 0
    %414 = vmatmul.mubr.bf16.gmra.mrb[0].mxu0 %v294
    %v415 = vpop.f32.mrb[0].mxu0
    %v416 = vadd.f32 %v316, %v415
    %v417 = vpop.f32.mrb[0].mxu0
    %v418 = vpop.f32.mrb[0].mxu0
    %v419 = vadd.f32 %v316, %v418
    %v420 = vpop.f32.mrb[0].mxu0
    %421 = vdwg.mxu0
    %v422 = vmax.f32 %v400, 0.0
    %v423 = vmax.f32 %v403, 0.0
    %v424 = vmax.f32 %v408, 0.0
    %v425 = vmax.f32 %v411, 0.0
    %v426 = vmax.f32 %v416, 0.0
    %v427 = vmax.f32 %v419, 0.0
    %v428 = vpack.c.bf16 %v423, %v422
    %v429 = vpack.c.bf16 %v425, %v424
    %v430 = vpack.c.bf16 %v427, %v426
    %v431 = vld [vmem:[#allocation5] sm:$0xf]
    %v432 = vld [vmem:[#allocation5 + $0x4] sm:$0xf]
    %v433 = vld [vmem:[#allocation5 + $0x8] sm:$0xf]
    %v434 = vld [vmem:[#allocation5 + $0xc] sm:$0xf]
    %v435 = vld [vmem:[#allocation5 + $0x10] sm:$0xf]
    %v436 = vld [vmem:[#allocation5 + $0x14] sm:$0xf]
    %v437 = vld [vmem:[#allocation5 + $0x18] sm:$0xf]
    %v438 = vld [vmem:[#allocation5 + $0x1c] sm:$0xf]
    %v439 = vld [vmem:[#allocation5 + $0x20] sm:$0xf]
    %v440 = vld [vmem:[#allocation5 + $0x24] sm:$0xf]
    %v441 = vld [vmem:[#allocation5 + $0x28] sm:$0xf]
    %v442 = vld [vmem:[#allocation5 + $0x2c] sm:$0xf]
    %v443 = vld [vmem:[#allocation5 + $0x30] sm:$0xf]
    %v444 = vld [vmem:[#allocation5 + $0x34] sm:$0xf]
    %v445 = vld [vmem:[#allocation5 + $0x38] sm:$0xf]
    %v446 = vld [vmem:[#allocation5 + $0x3c] sm:$0xf]
    %v447 = vld [vmem:[%s4 + $0x3] sm:$0x1]
    %v448 = vlaneseq
    %v449 = vshrl.u32 %v448, 7
    %v450 = vsub.s32 0, %v449
    %v451 = vrot.slane %v447, %v450
    %v468 = vunpack.c.l.b16 %v431
    %v469 = vunpack.c.l.b16 %v432
    %v470 = vunpack.c.l.b16 %v433
    %v471 = vunpack.c.l.b16 %v434
    %v472 = vunpack.c.l.b16 %v435
    %v473 = vunpack.c.l.b16 %v436
    %v474 = vunpack.c.l.b16 %v437
    %v475 = vunpack.c.l.b16 %v438
    %v476 = vunpack.c.l.b16 %v439
    %v477 = vunpack.c.l.b16 %v440
    %v478 = vunpack.c.l.b16 %v441
    %v479 = vunpack.c.l.b16 %v442
    %v480 = vunpack.c.l.b16 %v443
    %v481 = vunpack.c.l.b16 %v444
    %v482 = vunpack.c.l.b16 %v445
    %v483 = vunpack.c.l.b16 %v446
    %v484 = vpack.c.b16 %v469, %v468
    %v485 = vpack.c.b16 %v471, %v470
    %v486 = vpack.c.b16 %v473, %v472
    %v487 = vpack.c.b16 %v475, %v474
    %v488 = vpack.c.b16 %v477, %v476
    %v489 = vpack.c.b16 %v479, %v478
    %v490 = vpack.c.b16 %v481, %v480
    %v491 = vpack.c.b16 %v483, %v482
    %500 = vmatprep.subr.bf16.mxu0 0
    %501 = vmatpush1.bf16.msra.mxu0 %v484
    %502 = vmatprep.subr.bf16.mxu0 0
    %503 = vmatpush1.bf16.msra.mxu0 %v485
    %504 = vmatprep.subr.bf16.mxu0 0
    %505 = vmatpush1.bf16.msra.mxu0 %v486
    %506 = vmatprep.subr.bf16.mxu0 0
    %507 = vmatpush1.bf16.msra.mxu0 %v487
    %508 = vmatprep.subr.bf16.mxu0 0
    %509 = vmatpush1.bf16.msra.mxu0 %v488
    %510 = vmatprep.subr.bf16.mxu0 0
    %511 = vmatpush1.bf16.msra.mxu0 %v489
    %512 = vmatprep.subr.bf16.mxu0 0
    %513 = vmatpush1.bf16.msra.mxu0 %v490
    %514 = vmatprep.subr.bf16.mxu0 0
    %515 = vmatpush1.bf16.msra.mxu0 %v491
    %516 = vmatprep.subr.bf16.mxu0 0
    %517 = vmatpush1.bf16.msra.mxu0 0
    %518 = vmatprep.subr.bf16.mxu0 0
    %519 = vmatpush1.bf16.msra.mxu0 0
    %520 = vmatprep.subr.bf16.mxu0 0
    %521 = vmatpush1.bf16.msra.mxu0 0
    %522 = vmatprep.subr.bf16.mxu0 0
    %523 = vmatpush1.bf16.msra.mxu0 0
    %524 = vmatprep.subr.bf16.mxu0 0
    %525 = vmatpush1.bf16.msra.mxu0 0
    %526 = vmatprep.subr.bf16.mxu0 0
    %527 = vmatpush1.bf16.msra.mxu0 0
    %528 = vmatprep.subr.bf16.mxu0 0
    %529 = vmatpush1.bf16.msra.mxu0 0
    %530 = vmatprep.subr.bf16.mxu0 0
    %531 = vmatpush1.bf16.msra.mxu0 0
    %532 = vmatprep.mubr.bf16.mxu0 0
    %533 = vmatmul.mubr.bf16.gmra.mrb[0].mxu0 %v428
    %v534 = vpop.f32.mrb[0].mxu0
    %v535 = vadd.f32 %v451, %v534
    %v536 = vpop.f32.mrb[0].mxu0
    %v537 = vpop.f32.mrb[0].mxu0
    %v538 = vadd.f32 %v451, %v537
    %v539 = vpop.f32.mrb[0].mxu0
    %540 = vmatprep.mubr.bf16.mxu0 0
    %541 = vmatmul.mubr.bf16.gmra.mrb[0].mxu0 %v429
    %v542 = vpop.f32.mrb[0].mxu0
    %v543 = vadd.f32 %v451, %v542
    %v544 = vpop.f32.mrb[0].mxu0
    %v545 = vpop.f32.mrb[0].mxu0
    %v546 = vadd.f32 %v451, %v545
    %v547 = vpop.f32.mrb[0].mxu0
    %548 = vmatprep.mubr.bf16.mxu0 0
    %549 = vmatmul.mubr.bf16.gmra.mrb[0].mxu0 %v430
    %v550 = vpop.f32.mrb[0].mxu0
    %v551 = vadd.f32 %v451, %v550
    %v552 = vpop.f32.mrb[0].mxu0
    %v553 = vpop.f32.mrb[0].mxu0
    %v554 = vadd.f32 %v451, %v553
    %v555 = vpop.f32.mrb[0].mxu0
    %556 = vdwg.mxu0
    %v557 = vtanh.pop %v535
    %v558 = vtanh.pop %v538
    %v559 = vtanh.pop %v543
    %v560 = vtanh.pop %v546
    %v561 = vtanh.pop %v551
    %v562 = vtanh.pop %v554
    %563 = vst [vmem:[#allocation7] sm:$0xff] %v557
    %564 = vst [vmem:[#allocation7 + $0x8] sm:$0xff] %v558
    %565 = vst [vmem:[#allocation7 + $0x10] sm:$0xff] %v559
    %566 = vst [vmem:[#allocation7 + $0x18] sm:$0xff] %v560
    %567 = vst [vmem:[#allocation7 + $0x20] sm:$0xff] %v561
    %568 = vst [vmem:[#allocation7 + $0x28] sm:$0xff] %v562
    // Predicated region
    $region30: #{tpu_custom_call.1} parent=1 // pred_check
      _
    $region31: #{tpu_custom_call.1} parent=1 // pred_check_branch
      %570 = sbr.rel (0) target = $region33
    $region32: #{tpu_custom_call.1} parent=1 // pred_region
      %s572 = ssub.s32 768, 768
      %573 = vsyncadd [#allocation4], %s572
      %s574 = sshll.u32 [#allocation7], 4
      %s575 = int_to_ptr.vmem [resolvable:$true] %s574
      %580 = dma.vmem_to_hbm [thread:$0]  %s575, 768, %s5, [#allocation4], 128, 128, 8
    $region33: #{tpu_custom_call.1} parent=1 // pred_fallthru
      _
    // Predicated region
    $region34: #{tpu_custom_call.1} parent=1 // pred_check
      _
    $region35: #{tpu_custom_call.1} parent=1 // pred_check_branch
      %582 = sbr.rel (0) target = $region37
    $region36: #{tpu_custom_call.1} parent=1 // pred_region
      %583 = dma.done [#allocation4], 768
    $region37: #{tpu_custom_call.1} parent=1 // pred_fallthru
      _
    %584 = vsyncpa [#allocation3], 1
    %585 = vsyncpa [#allocation6], 1
    %586 = vsyncpa [#allocation4], 1

</llo_original>
